<compile_context>
chip_gen: v6e
topology: v6e:2x2x1
jax: 0.10.0
libtpu: 0.0.40
codegen_flags: <defaults>
</compile_context>

<pallas_src>
import math
import functools

import jax
import jax.numpy as jnp
from jax.experimental import pallas as pl
from jax.experimental.pallas import tpu as pltpu


# ---------------------------------------------------------------------------
# Kernels
# ---------------------------------------------------------------------------

def _krms_kernel(*refs, d_slice: int, inv_k: float, use_mask: bool, native_scale: bool):
    """Generic path (D >= 128 or unpackable): one logical row per tile row."""
    if use_mask:
        x_ref, gain_ref, mask_ref, o_ref = refs
    else:
        x_ref, gain_ref, o_ref = refs

    x_nat = x_ref[...]                                    # (tm, D), native dtype
    xs = x_nat[:, :d_slice].astype(jnp.float32)           # f32 only over reduce region
    y = xs * xs
    if use_mask:
        y = y * mask_ref[...]                             # precomputed tail mask (no iota)
    sumsq = jnp.sum(y, axis=-1, keepdims=True)            # (tm, 1)
    inv = jax.lax.rsqrt(sumsq * inv_k)                    # per-row rsqrt on EUP

    if native_scale:
        # bf16/f16: keep the dominant full-row multiply in the native dtype.
        o_ref[...] = (x_nat
                      * inv.astype(o_ref.dtype)
                      * gain_ref[...].astype(o_ref.dtype))
    else:
        o_ref[...] = (x_nat.astype(jnp.float32) * inv * gain_ref[...]).astype(o_ref.dtype)


def _krms_packed_kernel(*refs, p: int, d: int, inv_k: float,
                        use_mask: bool, native_scale: bool):
    """Lane-packed path for D < 128: each 128-lane row holds `p` logical rows."""
    if use_mask:
        x_ref, gain_ref, kmask_ref, o_ref = refs
    else:
        x_ref, gain_ref, o_ref = refs

    tm = x_ref.shape[0]
    x_nat = x_ref[...]                                    # (tm, p*d), lane-dense
    xf = x_nat.astype(jnp.float32)

    y = xf * xf
    if use_mask:
        y = y * kmask_ref[...]                            # zero cols >= k per segment
    # Segmented sum of squares: (tm, p*d) -> (tm, p, d) -> reduce last dim.
    sumsq = jnp.sum(y.reshape(tm, p, d), axis=-1)         # (tm, p)
    inv = jax.lax.rsqrt(sumsq * inv_k)                    # (tm, p)

    # Broadcast inv back per d-lane segment, then fold in the (tiled) gain.
    inv_b = jnp.broadcast_to(inv[:, :, None], (tm, p, d)).reshape(tm, p * d)
    scale = inv_b * gain_ref[...]                         # (tm, p*d), f32

    if native_scale:
        o_ref[...] = x_nat * scale.astype(o_ref.dtype)
    else:
        o_ref[...] = (xf * scale).astype(o_ref.dtype)


# ---------------------------------------------------------------------------
# Tiling helpers
# ---------------------------------------------------------------------------

def _round_up(n: int, m: int) -> int:
    return ((n + m - 1) // m) * m


def _vmem_capacity_bytes() -> int:
    try:
        return int(pltpu.get_tpu_info().vmem_capacity_bytes)
    except Exception:
        return 64 << 20            # conservative (v7x-sized) fallback


def _per_row_vmem_bytes(d_eff: int, itemsize: int) -> int:
    # Double-buffered input + output tiles, plus headroom for the in-kernel
    # f32 temporaries (squares / scale) that exist even for bf16 inputs.
    return 4 * d_eff * itemsize + 12 * d_eff


def _choose_tile(rows: int, d_eff: int, itemsize: int, budget_bytes: int):
    """Pick (tm, grid_len): the biggest row tile that fits the VMEM budget while
    keeping enough (and preferably an even number of) grid steps for
    pipelining and the v7x 2-TC split."""
    per_row = _per_row_vmem_bytes(d_eff, itemsize)
    tm_cap = max(8, min(budget_bytes // per_row, 8192))
    tm_cap -= tm_cap % 8

    if rows <= 8:
        return rows, 1                               # tiny input: one full-extent block

    # >= 8 steps when rows permit (pipeline overlap, 2-TC split); never fewer
    # than needed to respect the VMEM-derived row cap.
    steps = max(pl.cdiv(rows, tm_cap), min(8, pl.cdiv(rows, 8)))
    tm = min(rows, _round_up(pl.cdiv(rows, steps), 8))
    g = pl.cdiv(rows, tm)
    if g > 1 and g % 2 == 1:
        # Best effort: make the grid even so both v7x TensorCores split evenly.
        tm_alt = min(rows, _round_up(pl.cdiv(rows, g + 1), 8))
        if tm_alt >= 1 and pl.cdiv(rows, tm_alt) % 2 == 0:
            tm = tm_alt
            g = pl.cdiv(rows, tm)
    return tm, g


# ---------------------------------------------------------------------------
# pallas_call launcher
# ---------------------------------------------------------------------------

def _launch(kernel, x_in, extras, tm_user, vmem_budget, vmem_cap):
    rows_eff, d_eff = x_in.shape
    itemsize = jnp.dtype(x_in.dtype).itemsize

    if tm_user is None:
        tm, _ = _choose_tile(rows_eff, d_eff, itemsize, vmem_budget)
    else:
        per_row = _per_row_vmem_bytes(d_eff, itemsize)
        cap = max(8, vmem_budget // per_row)
        tm = max(1, min(int(tm_user), rows_eff, cap))
        if tm != rows_eff:
            tm = max(8, (tm // 8) * 8)
            tm = min(tm, rows_eff)                   # multiple of 8 or full extent
    grid = (pl.cdiv(rows_eff, tm),)

    in_specs = [pl.BlockSpec((tm, d_eff), lambda i: (i, 0))]
    in_arrays = [x_in]
    for arr in extras:
        r, c = arr.shape
        in_specs.append(pl.BlockSpec((r, c), lambda i: (0, 0)))   # DMA'd once
        in_arrays.append(arr)

    # VMEM limit: double-buffered in+out tiles + f32 temp headroom + margin.
    need = tm * d_eff * (4 * itemsize + 12) + (2 << 20)
    vmem_limit = int(min(max(need, 32 << 20), min((vmem_cap * 7) // 8, 100 << 20)))

    return pl.pallas_call(
        kernel,
        out_shape=jax.ShapeDtypeStruct((rows_eff, d_eff), x_in.dtype),
        grid_spec=pltpu.PrefetchScalarGridSpec(
            num_scalar_prefetch=0,
            grid=grid,
            in_specs=in_specs,
            out_specs=pl.BlockSpec((tm, d_eff), lambda i: (i, 0)),
        ),
        compiler_params=pltpu.CompilerParams(
            dimension_semantics=("parallel",),
            vmem_limit_bytes=vmem_limit,
        ),
    )(*in_arrays)


def _krms_packed_call(x_packed, gain_f32, k_eff, p, d, inv_k, native_scale,
                      tm_user, vmem_budget, vmem_cap):
    d_eff = p * d
    gain_in = jnp.tile(gain_f32, p).reshape(1, d_eff)
    use_mask = (k_eff != d)
    extras = [gain_in]
    if use_mask:
        kmask = ((jnp.arange(d_eff, dtype=jnp.int32) % d) < k_eff).astype(jnp.float32)
        extras.append(kmask.reshape(1, d_eff))
    kernel = functools.partial(_krms_packed_kernel, p=p, d=d, inv_k=inv_k,
                               use_mask=use_mask, native_scale=native_scale)
    return _launch(kernel, x_packed, extras, tm_user, vmem_budget, vmem_cap)


# ---------------------------------------------------------------------------
# Public wrapper
# ---------------------------------------------------------------------------

def krmsnorm(x: jax.Array, gain: jax.Array, k: int, *,
             tm: int | None = None, vmem_budget_bytes: int | None = None) -> jax.Array:
    """Apply first-k RMS norm over the last dim of x (any leading dims)."""
    orig_shape = x.shape
    d = orig_shape[-1]
    k_eff = min(d, int(k))
    inv_k = 1.0 / float(k_eff)

    x2 = x.reshape(-1, d)
    rows = x2.shape[0]
    gain_f32 = jnp.asarray(gain, dtype=jnp.float32).reshape(d)
    native_scale = (x.dtype == jnp.bfloat16) or (x.dtype == jnp.float16)

    vmem_cap = _vmem_capacity_bytes()
    if vmem_budget_bytes is None:
        # ~3/8 of physical VMEM: ~24 MiB on v7x (64 MiB), ~48 MiB on v5e/v6e (128 MiB).
        vmem_budget_bytes = max(16 << 20, (vmem_cap * 3) // 8)

    # Lane-dense packing: P logical rows per 128-lane row when D < 128.
    if (d < 128) and (128 % d == 0):
        p = 128 // d
        rows_main = (rows // p) * p
        pieces = []
        if rows_main:
            xm = x2[:rows_main].reshape(rows_main // p, p * d)   # free row-major reshape
            om = _krms_packed_call(xm, gain_f32, k_eff, p, d, inv_k, native_scale,
                                   tm, vmem_budget_bytes, vmem_cap)
            pieces.append(om.reshape(rows_main, d))
        rem = rows - rows_main
        if rem:
            # Keep the store lane-dense: pad the (< p)-row remainder with ones
            # (never read back) and run one tiny packed row.
            pad = jnp.ones((p - rem, d), dtype=x.dtype)
            xr = jnp.concatenate([x2[rows_main:], pad], axis=0).reshape(1, p * d)
            orr = _krms_packed_call(xr, gain_f32, k_eff, p, d, inv_k, native_scale,
                                    None, vmem_budget_bytes, vmem_cap)
            pieces.append(orr.reshape(p, d)[:rem])
        out2 = pieces[0] if len(pieces) == 1 else jnp.concatenate(pieces, axis=0)
        return out2.reshape(orig_shape)

    # Generic path (D >= 128, or not evenly packable).
    d_slice = d if k_eff == d else min(d, _round_up(k_eff, 128))
    use_mask = (d_slice != k_eff)
    extras = [gain_f32.reshape(1, d)]
    if use_mask:
        mask = (jnp.arange(d_slice, dtype=jnp.int32) < k_eff).astype(jnp.float32)
        extras.append(mask.reshape(1, d_slice))
    kernel = functools.partial(_krms_kernel, d_slice=d_slice, inv_k=inv_k,
                               use_mask=use_mask, native_scale=native_scale)
    out2 = _launch(kernel, x2, extras, tm, vmem_budget_bytes, vmem_cap)
    return out2.reshape(orig_shape)


def krmsnorm_reference(x, gain, k):
    k_eff = min(x.shape[-1], k)
    x_part = x[..., :k_eff].astype(jnp.float32)
    krms = jnp.sqrt(jnp.sum(x_part * x_part, axis=-1, keepdims=True)) / math.sqrt(k_eff)
    return (x.astype(jnp.float32) / krms * jnp.asarray(gain, jnp.float32)).astype(x.dtype)


if __name__ == "__main__":
    # config: n_embd = 32, krmsnorm_num = 8   (exercises the lane-packed path)
    n_embd, krmsnorm_num = 32, 8
    B, T = 2, 8

    key = jax.random.PRNGKey(0)
    x = jax.random.normal(key, (B, T, n_embd), dtype=jnp.float32)
    gain = jnp.ones((n_embd,), dtype=jnp.float32)      # nn.Parameter(torch.ones(ndim))

    out = jax.block_until_ready(krmsnorm(x, gain, krmsnorm_num))
    ref = krmsnorm_reference(x, gain, krmsnorm_num)
    assert out.shape == x.shape and out.dtype == x.dtype
    assert jnp.allclose(out, ref, atol=1e-5, rtol=1e-5), "mismatch (packed path)"

    # Generic (D >= 128) path: ragged k, precomputed mask, multi-step grid.
    x2 = jax.random.normal(jax.random.PRNGKey(1), (4, 8, 256), dtype=jnp.float32)
    g2 = 1.0 + 0.1 * jax.random.normal(jax.random.PRNGKey(2), (256,), dtype=jnp.float32)
    out2 = jax.block_until_ready(krmsnorm(x2, g2, 100))
    ref2 = krmsnorm_reference(x2, g2, 100)
    assert jnp.allclose(out2, ref2, atol=1e-5, rtol=1e-5), "mismatch (generic path)"

    # Packed path with a row remainder (rows % p != 0) — stays lane-dense.
    x3 = jax.random.normal(jax.random.PRNGKey(3), (3, 5, 32), dtype=jnp.float32)
    g3 = 1.0 + 0.1 * jax.random.normal(jax.random.PRNGKey(4), (32,), dtype=jnp.float32)
    out3 = jax.block_until_ready(krmsnorm(x3, g3, 8))
    ref3 = krmsnorm_reference(x3, g3, 8)
    assert jnp.allclose(out3, ref3, atol=1e-5, rtol=1e-5), "mismatch (packed remainder)"

    # bf16 input: reduce in f32, output scale in native dtype (looser tolerance).
    xb = jax.random.normal(jax.random.PRNGKey(5), (2, 8, n_embd),
                           dtype=jnp.float32).astype(jnp.bfloat16)
    outb = jax.block_until_ready(krmsnorm(xb, gain, krmsnorm_num))
    refb = krmsnorm_reference(xb, gain, krmsnorm_num)
    assert outb.dtype == jnp.bfloat16
    assert jnp.allclose(outb.astype(jnp.float32), refb.astype(jnp.float32),
                        atol=5e-2, rtol=5e-2), "mismatch (bf16 native scale)"

    print("KERNEL_OK")
</pallas_src>

<mosaic_0001>
module attributes {stable_mosaic.version = 11 : i64} {
  func.func @_krms_packed_kernel(%arg0: i32, %arg1: memref<4x128xf32, #tpu.memory_space<vmem>>, %arg2: memref<1x128xf32, #tpu.memory_space<vmem>>, %arg3: memref<1x128xf32, #tpu.memory_space<vmem>>, %arg4: memref<4x128xf32, #tpu.memory_space<vmem>>) attributes {dimension_semantics = [#tpu.dimension_semantics<parallel>], iteration_bounds = array<i64: 1>, scalar_prefetch = 0 : i64, scratch_operands = 0 : i64, tpu.core_type = #tpu.core_type<tc>, window_params = [{transform_indices = @transform_0, window_bounds = array<i64: 4, 128>}, {pipeline_mode = #tpu.pipeline_mode<synchronous>, transform_indices = @transform_1, window_bounds = array<i64: 1, 128>}, {pipeline_mode = #tpu.pipeline_mode<synchronous>, transform_indices = @transform_2, window_bounds = array<i64: 1, 128>}, {transform_indices = @transform_3, window_bounds = array<i64: 4, 128>}]} {
    %c0 = arith.constant 0 : index
    %c0_0 = arith.constant 0 : index
    %0 = vector.load %arg1[%c0, %c0_0] : memref<4x128xf32, #tpu.memory_space<vmem>>, vector<4x128xf32>
    %1 = arith.mulf %0, %0 : vector<4x128xf32>
    %c0_1 = arith.constant 0 : index
    %c0_2 = arith.constant 0 : index
    %2 = vector.load %arg3[%c0_1, %c0_2] : memref<1x128xf32, #tpu.memory_space<vmem>>, vector<1x128xf32>
    %3 = vector.broadcast %2 : vector<1x128xf32> to vector<4x128xf32>
    %4 = arith.mulf %1, %3 : vector<4x128xf32>
    %5 = vector.shape_cast %4 : vector<4x128xf32> to vector<4x4x32xf32>
    %cst = arith.constant dense<0.000000e+00> : vector<4x4xf32>
    %6 = vector.multi_reduction <add>, %5, %cst [2] : vector<4x4x32xf32> to vector<4x4xf32>
    %cst_3 = arith.constant 1.250000e-01 : f32
    %7 = vector.broadcast %cst_3 : f32 to vector<4x4xf32>
    %8 = arith.mulf %6, %7 : vector<4x4xf32>
    %9 = math.rsqrt %8 : vector<4x4xf32>
    %10 = vector.shape_cast %9 : vector<4x4xf32> to vector<4x4x1xf32>
    %11 = vector.shape_cast %10 : vector<4x4x1xf32> to vector<4x4x1xf32>
    %12 = vector.broadcast %11 : vector<4x4x1xf32> to vector<4x4x32xf32>
    %13 = vector.shape_cast %12 : vector<4x4x32xf32> to vector<4x128xf32>
    %c0_4 = arith.constant 0 : index
    %c0_5 = arith.constant 0 : index
    %14 = vector.load %arg2[%c0_4, %c0_5] : memref<1x128xf32, #tpu.memory_space<vmem>>, vector<1x128xf32>
    %15 = vector.broadcast %14 : vector<1x128xf32> to vector<4x128xf32>
    %16 = arith.mulf %13, %15 : vector<4x128xf32>
    %17 = arith.mulf %0, %16 : vector<4x128xf32>
    %c0_6 = arith.constant 0 : index
    %c0_7 = arith.constant 0 : index
    %18 = vector.load %arg4[%c0_6, %c0_7] : memref<4x128xf32, #tpu.memory_space<vmem>>, vector<4x128xf32>
    tpu.vector_store %arg4[%c0_6, %c0_7], %17 {strides = array<i32>} : memref<4x128xf32, #tpu.memory_space<vmem>>, vector<4x128xf32>,
    return
  }
  func.func @transform_0(%arg0: i32) -> (i32, i32) {
    %c0_i32 = arith.constant 0 : i32
    %c0_i32_0 = arith.constant 0 : i32
    return %arg0, %c0_i32 : i32, i32
  }
  func.func @transform_1(%arg0: i32) -> (i32, i32) {
    %c0_i32 = arith.constant 0 : i32
    %c0_i32_0 = arith.constant 0 : i32
    %c0_i32_1 = arith.constant 0 : i32
    return %c0_i32, %c0_i32_0 : i32, i32
  }
  func.func @transform_2(%arg0: i32) -> (i32, i32) {
    %c0_i32 = arith.constant 0 : i32
    %c0_i32_0 = arith.constant 0 : i32
    %c0_i32_1 = arith.constant 0 : i32
    return %c0_i32, %c0_i32_0 : i32, i32
  }
  func.func @transform_3(%arg0: i32) -> (i32, i32) {
    %c0_i32 = arith.constant 0 : i32
    %c0_i32_0 = arith.constant 0 : i32
    return %arg0, %c0_i32 : i32, i32
  }
}

</mosaic_0001>

<llo_original>
// kernel: tpu_custom_call.1
$region0: #{tpu_custom_call.1}
  #allocation0 [shape = 'u32[]', space=smem, size = 0x4, offset = 0x4, fixed_abs, tag = 'smem constant byte address 0x4 - core index']
  #allocation1 [shape = 'u32[144,128]{1,0:T(1,128)}', space=vmem, size = 0x12000, scoped, tag = 'internal scratch']
  %s0 = inlined_call_operand.hbm [shape: f32[4,128], index: 0, kind: input, shape index: {}]
  %s1 = inlined_call_operand.vmem [shape: f32[1,128], index: 1, kind: input, shape index: {}]
  %s2 = inlined_call_operand.vmem [shape: f32[1,128], index: 2, kind: input, shape index: {}]
  %s3 = inlined_call_operand.hbm [shape: f32[4,128], index: 3, kind: output, shape index: {}]
  %s4 = sld [smem:[#allocation0]]
  $region26: #{tpu_custom_call.1} parent=0
    _
  %s6 = ssub.s32 1, %s4
  %s7 = scalar_select 0, %s6, %s4
  $region1: #{tpu_custom_call.1} parent=0
    #allocation2 [shape = 'u8[2048]{0}', space=vmem, size = 0x800, scoped, tag = 'input window, operand 0, single buffered']
    #allocation3 [shape = 's32[1]{0}', space=sflag, size = 0x4, scoped, tag = 'scoped memory for tpu_custom_call.1']
    #allocation4 [shape = 's32[1]{0}', space=sflag, size = 0x4, scoped, tag = 'scoped memory for tpu_custom_call.1']
    #allocation5 [shape = 'u8[2048]{0}', space=vmem, size = 0x800, scoped, tag = 'output window, operand 0, single buffered']
    %8 = vsyncpa [#allocation3], 0
    %9 = vsyncpa [#allocation4], 0
    // Predicated region
    $region2: #{tpu_custom_call.1} parent=1 // pred_check
      _
    $region3: #{tpu_custom_call.1} parent=1 // pred_check_branch
      %11 = sbr.rel (0) target = $region5
    $region4: #{tpu_custom_call.1} parent=1 // pred_region
      %s13 = ssub.s32 64, 64
      %14 = vsyncadd [#allocation3], %s13
      %s16 = sshll.u32 [#allocation2], 4
      %s17 = int_to_ptr.vmem [resolvable:$true] %s16
      %19 = dma.hbm_to_vmem [thread:$0]  %s0, 64, %s17, [#allocation3]
    $region5: #{tpu_custom_call.1} parent=1 // pred_fallthru
      _
    // Predicated region
    $region6: #{tpu_custom_call.1} parent=1 // pred_check
      _
    $region7: #{tpu_custom_call.1} parent=1 // pred_check_branch
      %21 = sbr.rel (0) target = $region9
    $region8: #{tpu_custom_call.1} parent=1 // pred_region
      _
    $region9: #{tpu_custom_call.1} parent=1 // pred_fallthru
      _
    // Predicated region
    $region10: #{tpu_custom_call.1} parent=1 // pred_check
      _
    $region11: #{tpu_custom_call.1} parent=1 // pred_check_branch
      %23 = sbr.rel (0) target = $region13
    $region12: #{tpu_custom_call.1} parent=1 // pred_region
      _
    $region13: #{tpu_custom_call.1} parent=1 // pred_fallthru
      _
    // Predicated region
    $region14: #{tpu_custom_call.1} parent=1 // pred_check
      _
    $region15: #{tpu_custom_call.1} parent=1 // pred_check_branch
      %25 = sbr.rel (0) target = $region17
    $region16: #{tpu_custom_call.1} parent=1 // pred_region
      %26 = dma.done [#allocation3], 64
    $region17: #{tpu_custom_call.1} parent=1 // pred_fallthru
      _
    %v27 = vld [vmem:[#allocation2] sm:$0xf]
    %v28 = vmul.f32 %v27, %v27
    %v29 = vld [vmem:[%s2] sm:$0x1]
    %v31 = vlaneseq
    %v32 = vshrl.u32 %v31, 7
    %v33 = vsub.s32 0, %v32
    %v34 = vrot.slane %v29, %v33
    %v36 = vmul.f32 %v28, %v34
    %38 = vrot.lane.b32.xlu0 %v36, 96
    %v39 = vpop.permute.xlu0 %38
    %41 = vrot.lane.b32.xlu0 %v36, 64
    %v42 = vpop.permute.xlu0 %41
    %44 = vrot.lane.b32.xlu0 %v36, 32
    %v45 = vpop.permute.xlu0 %44
    %v47 = vcombine.low %v36, %v42
    %v49 = vunpack.c.l.s4 1983009808
    %v50 = vunpack.c.0.s8 %v49
    %v51 = vlaneseq
    %v52 = vshrl.u32 %v51, 7
    %v53 = vsub.s32 %v50, %v52
    %v54 = vrot.slane %v47, %v53
    %v55 = vcombine.low %v39, %v45
    %v57 = vunpack.c.l.s4 1983009808
    %v58 = vunpack.c.0.s8 %v57
    %v59 = vlaneseq
    %v60 = vshrl.u32 %v59, 7
    %v61 = vsub.s32 %v58, %v60
    %v62 = vrot.slane %v55, %v61
    %v63 = vcombine.low %v54, %v62
    %v64 = vcombine.high %v54, %v62
    %v66 = vunpack.c.l.s4 1934713408
    %v67 = vunpack.c.0.s8 %v66
    %v68 = vlaneseq
    %v69 = vshrl.u32 %v68, 7
    %v70 = vsub.s32 %v67, %v69
    %v71 = vrot.slane %v63, %v70
    %v73 = vunpack.c.l.s4 1934713408
    %v74 = vunpack.c.0.s8 %v73
    %v75 = vlaneseq
    %v76 = vshrl.u32 %v75, 7
    %v77 = vsub.s32 %v74, %v76
    %v78 = vrot.slane %v64, %v77
    %v79 = vcombine.high %v71, 0.0
    %v80 = vcombine.high %v78, 0.0
    %vm81 = vcmask 257024
    %v82 = vsel %vm81, %v71, 0.0
    %83 = vadd.xlane.f32.xlu0 %v82
    %v84 = vpop.xlane.xlu0 %83
    %v85 = vsel %vm81, %v79, 0.0
    %86 = vadd.xlane.f32.xlu0 %v85
    %v87 = vpop.xlane.xlu0 %86
    %v88 = vsel %vm81, %v78, 0.0
    %89 = vadd.xlane.f32.xlu0 %v88
    %v90 = vpop.xlane.xlu0 %89
    %v91 = vsel %vm81, %v80, 0.0
    %92 = vadd.xlane.f32.xlu0 %v91
    %v93 = vpop.xlane.xlu0 %92
    %v94 = vmul.f32 %v84, 0.125
    %v95 = vmul.f32 %v87, 0.125
    %v96 = vmul.f32 %v90, 0.125
    %v97 = vmul.f32 %v93, 0.125
    %v98 = vrsqrt.pop %v94
    %v99 = vrsqrt.pop %v95
    %v100 = vrsqrt.pop %v96
    %v101 = vrsqrt.pop %v97
    %v102 = vcombine.low %v98, %v100
    %v104 = vunpack.c.l.s4 1983009808
    %v105 = vunpack.c.0.s8 %v104
    %v106 = vlaneseq
    %v107 = vshrl.u32 %v106, 7
    %v108 = vsub.s32 %v105, %v107
    %v109 = vrot.slane %v102, %v108
    %v110 = vcombine.low %v99, %v101
    %v112 = vunpack.c.l.s4 1983009808
    %v113 = vunpack.c.0.s8 %v112
    %v114 = vlaneseq
    %v115 = vshrl.u32 %v114, 7
    %v116 = vsub.s32 %v113, %v115
    %v117 = vrot.slane %v110, %v116
    %v118 = vcombine.low %v109, %v117
    %v119 = vcombine.high %v109, %v117
    %v121 = vunpack.c.l.s4 1934713408
    %v122 = vunpack.c.0.s8 %v121
    %v123 = vlaneseq
    %v124 = vshrl.u32 %v123, 7
    %v125 = vsub.s32 %v122, %v124
    %v126 = vrot.slane %v118, %v125
    %v128 = vunpack.c.l.s4 1934713408
    %v129 = vunpack.c.0.s8 %v128
    %v130 = vlaneseq
    %v131 = vshrl.u32 %v130, 7
    %v132 = vsub.s32 %v129, %v131
    %v133 = vrot.slane %v119, %v132
    %v134 = vcombine.high %v126, 0.0
    %v135 = vcombine.high %v133, 0.0
    %137 = vrot.lane.b32.xlu0 %v134, 32
    %v138 = vpop.permute.xlu0 %137
    %141 = vrot.lane.b32.xlu0 %v133, 64
    %v142 = vpop.permute.xlu0 %141
    %145 = vrot.lane.b32.xlu0 %v135, 96
    %v146 = vpop.permute.xlu0 %145
    %vm148 = vcmask 261120
    %v149 = vsel %vm148, %v126, %v138
    %vm150 = vcmask 523264
    %v151 = vsel %vm150, %v149, %v142
    %vm152 = vcmask 785408
    %v153 = vsel %vm152, %v151, %v146
    %v154 = vld [vmem:[%s1] sm:$0x1]
    %v156 = vlaneseq
    %v157 = vshrl.u32 %v156, 7
    %v158 = vsub.s32 0, %v157
    %v159 = vrot.slane %v154, %v158
    %v161 = vmul.f32 %v153, %v159
    %v162 = vmul.f32 %v27, %v161
    %163 = vst [vmem:[#allocation5] sm:$0xf] %v162
    // Predicated region
    $region18: #{tpu_custom_call.1} parent=1 // pred_check
      _
    $region19: #{tpu_custom_call.1} parent=1 // pred_check_branch
      %165 = sbr.rel (0) target = $region21
    $region20: #{tpu_custom_call.1} parent=1 // pred_region
      %s167 = ssub.s32 64, 64
      %168 = vsyncadd [#allocation4], %s167
      %s170 = sshll.u32 [#allocation5], 4
      %s171 = int_to_ptr.vmem [resolvable:$true] %s170
      %173 = dma.vmem_to_hbm [thread:$0]  %s171, 64, %s3, [#allocation4]
    $region21: #{tpu_custom_call.1} parent=1 // pred_fallthru
      _
    // Predicated region
    $region22: #{tpu_custom_call.1} parent=1 // pred_check
      _
    $region23: #{tpu_custom_call.1} parent=1 // pred_check_branch
      %175 = sbr.rel (0) target = $region25
    $region24: #{tpu_custom_call.1} parent=1 // pred_region
      %176 = dma.done [#allocation4], 64
    $region25: #{tpu_custom_call.1} parent=1 // pred_fallthru
      _
    %177 = vsyncpa [#allocation3], 1
    %178 = vsyncpa [#allocation4], 1

</llo_original>
